<compile_context>
chip_gen: v7x
topology: tpu7x:2x2x1
jax: 0.10.0
libtpu: 0.0.40
codegen_flags: <defaults>
</compile_context>

<pallas_src>
import jax
import jax.numpy as jnp
import numpy as np
from jax import lax
from jax.experimental import pallas as pl
from jax.experimental.pallas import tpu as pltpu


# ------------------------------ Pallas kernel ------------------------------- #

def _make_ofe_kernel(num_layers, output_logits):
    """Fused dense-net MLP + fc + LayerNorm (+tanh) kernel.

    Ref order (all refs 2-D, weights pre-transposed to (in_chunk, out)):
      obs_ref,
      for layer i in [0, num_layers): (i+1) weight-chunk refs, bias ref,
      (num_layers + 1) fc weight-chunk refs, fc bias, ln gamma, ln beta,
      out_ref.
    """

    def kernel(*refs):
        refs = list(refs)
        out_ref = refs.pop()          # single output ref (last)
        obs_ref = refs.pop(0)

        feats = [obs_ref[...]]        # feature blocks: [obs, h1, h2, ...]
        idx = 0

        # Dense-net hidden layers: h_i = relu(sum_k feats[k] @ W_i,k + b_i)
        for i in range(num_layers):
            nchunks = i + 1
            acc = jnp.dot(feats[0], refs[idx][...],
                          preferred_element_type=jnp.float32)
            for k in range(1, nchunks):
                acc = acc + jnp.dot(feats[k], refs[idx + k][...],
                                    preferred_element_type=jnp.float32)
            idx += nchunks
            acc = acc + refs[idx][...]            # bias (1, H)
            idx += 1
            feats.append(jnp.maximum(acc, 0.0))   # ReLU

        # Final fc over the (virtual) concatenation, again chunk-wise.
        nchunks = num_layers + 1
        y = jnp.dot(feats[0], refs[idx][...],
                    preferred_element_type=jnp.float32)
        for k in range(1, nchunks):
            y = y + jnp.dot(feats[k], refs[idx + k][...],
                            preferred_element_type=jnp.float32)
        idx += nchunks
        y = y + refs[idx][...]                    # fc bias
        g = refs[idx + 1][...]                    # LayerNorm gamma
        beta = refs[idx + 2][...]                 # LayerNorm beta

        # LayerNorm (biased variance, eps=1e-5, matching nn.LayerNorm).
        mu = jnp.mean(y, axis=-1, keepdims=True)
        var = jnp.mean((y - mu) ** 2, axis=-1, keepdims=True)
        y = (y - mu) * lax.rsqrt(var + 1e-5) * g + beta

        out_ref[...] = y if output_logits else jnp.tanh(y)

    return kernel


# ----------------------------- pallas_call glue ----------------------------- #

def ofe_encoder_forward(obs, params, *, num_layers, batch_tile=8,
                        output_logits=False):
    """obs: (N, obs_dim) float32 -> (N, feature_dim) float32."""
    N, obs_dim = obs.shape
    hidden = params["w"][0].shape[0]                 # torch layout (out, in)
    feature_dim = num_layers * hidden + obs_dim
    assert N % batch_tile == 0, "batch must be a multiple of batch_tile"

    block_dims = [obs_dim] + [hidden] * num_layers   # widths of [obs, h1, ...]

    inputs = [obs.astype(jnp.float32)]
    in_specs = [pl.BlockSpec((batch_tile, obs_dim), lambda n: (n, 0))]

    def add_param(arr):
        arr = jnp.asarray(arr, jnp.float32)
        inputs.append(arr)
        in_specs.append(pl.BlockSpec(arr.shape, lambda n: (0, 0)))

    # Dense-net linears: split each torch (out, in) weight along its input dim
    # into per-feature-block chunks and transpose to (in_chunk, out).
    for i in range(num_layers):
        W = params["w"][i]                           # (hidden, obs_dim + i*hidden)
        off = 0
        for k in range(i + 1):
            add_param(W[:, off:off + block_dims[k]].T)
            off += block_dims[k]
        add_param(params["b"][i].reshape(1, hidden))

    # Final fc (feature_dim -> feature_dim), split the same way.
    Wfc = params["fc_w"]
    off = 0
    for k in range(num_layers + 1):
        add_param(Wfc[:, off:off + block_dims[k]].T)
        off += block_dims[k]
    add_param(params["fc_b"].reshape(1, feature_dim))
    add_param(params["ln_g"].reshape(1, feature_dim))
    add_param(params["ln_b"].reshape(1, feature_dim))

    kernel = _make_ofe_kernel(num_layers, output_logits)
    return pl.pallas_call(
        kernel,
        out_shape=jax.ShapeDtypeStruct((N, feature_dim), jnp.float32),
        grid=(N // batch_tile,),
        in_specs=in_specs,
        out_specs=pl.BlockSpec((batch_tile, feature_dim), lambda n: (n, 0)),
        compiler_params=pltpu.CompilerParams(
            dimension_semantics=("parallel",)),
    )(*inputs)
    # TODO(synk): `detach` (autograd-only) and the `self.outputs` logging dict
    # are training/bookkeeping concerns with no kernel-side equivalent.


# ------------------------------- parameters --------------------------------- #

def init_params(key, obs_dim, hidden, num_layers):
    """PyTorch-default uniform(-1/sqrt(fan_in), 1/sqrt(fan_in)) init."""
    feature_dim = num_layers * hidden + obs_dim
    keys = jax.random.split(key, 2 * (num_layers + 1))

    def unif(k, shape, fan_in):
        lim = 1.0 / np.sqrt(fan_in)
        return jax.random.uniform(k, shape, jnp.float32, -lim, lim)

    w, b = [], []
    in_dim = obs_dim
    for i in range(num_layers):
        w.append(unif(keys[2 * i], (hidden, in_dim), in_dim))
        b.append(unif(keys[2 * i + 1], (hidden,), in_dim))
        in_dim = obs_dim + (i + 1) * hidden

    return {
        "w": w,
        "b": b,
        "fc_w": unif(keys[-2], (feature_dim, feature_dim), feature_dim),
        "fc_b": unif(keys[-1], (feature_dim,), feature_dim),
        "ln_g": jnp.ones((feature_dim,), jnp.float32),
        "ln_b": jnp.zeros((feature_dim,), jnp.float32),
    }


# ------------------------------- pure-JAX ref -------------------------------- #

def ref_forward(obs, params, num_layers, output_logits=False):
    x = jnp.concatenate(
        [obs, jax.nn.relu(obs @ params["w"][0].T + params["b"][0])], axis=1)
    for i in range(1, num_layers):
        x = jnp.concatenate(
            [x, jax.nn.relu(x @ params["w"][i].T + params["b"][i])], axis=1)
    y = x @ params["fc_w"].T + params["fc_b"]
    mu = y.mean(-1, keepdims=True)
    var = ((y - mu) ** 2).mean(-1, keepdims=True)
    y = (y - mu) / jnp.sqrt(var + 1e-5) * params["ln_g"] + params["ln_b"]
    return y if output_logits else jnp.tanh(y)


# ----------------------------------- main ------------------------------------ #

if __name__ == "__main__":
    key = jax.random.PRNGKey(0)
    k_obs, k_param = jax.random.split(key)

    obs_dim = 32            # obs_shape = (32,)
    hidden = 32             # encoder_hidden_size
    num_layers = 2
    batch = 16
    feature_dim = num_layers * hidden + obs_dim   # 96

    obs = jax.random.normal(k_obs, (batch, obs_dim), jnp.float32)
    params = init_params(k_param, obs_dim, hidden, num_layers)

    out = ofe_encoder_forward(obs, params, num_layers=num_layers, batch_tile=8)
    out = jax.block_until_ready(out)

    ref = jax.block_until_ready(ref_forward(obs, params, num_layers))
    np.testing.assert_allclose(np.asarray(out), np.asarray(ref),
                               atol=1e-2, rtol=1e-2)
    assert out.shape == (batch, feature_dim)
    assert bool(jnp.all(jnp.isfinite(out)))

    print("KERNEL_OK")
</pallas_src>

<mosaic_0001>
module attributes {stable_mosaic.version = 11 : i64} {
  func.func @kernel(%arg0: i32, %arg1: memref<8x32xf32, #tpu.memory_space<vmem>>, %arg2: memref<32x32xf32, #tpu.memory_space<vmem>>, %arg3: memref<1x32xf32, #tpu.memory_space<vmem>>, %arg4: memref<32x32xf32, #tpu.memory_space<vmem>>, %arg5: memref<32x32xf32, #tpu.memory_space<vmem>>, %arg6: memref<1x32xf32, #tpu.memory_space<vmem>>, %arg7: memref<32x96xf32, #tpu.memory_space<vmem>>, %arg8: memref<32x96xf32, #tpu.memory_space<vmem>>, %arg9: memref<32x96xf32, #tpu.memory_space<vmem>>, %arg10: memref<1x96xf32, #tpu.memory_space<vmem>>, %arg11: memref<1x96xf32, #tpu.memory_space<vmem>>, %arg12: memref<1x96xf32, #tpu.memory_space<vmem>>, %arg13: memref<8x96xf32, #tpu.memory_space<vmem>>) attributes {dimension_semantics = [#tpu.dimension_semantics<parallel>], iteration_bounds = array<i64: 2>, scalar_prefetch = 0 : i64, scratch_operands = 0 : i64, tpu.core_type = #tpu.core_type<tc>, window_params = [{transform_indices = @transform_0, window_bounds = array<i64: 8, 32>}, {pipeline_mode = #tpu.pipeline_mode<synchronous>, transform_indices = @transform_1, window_bounds = array<i64: 32, 32>}, {pipeline_mode = #tpu.pipeline_mode<synchronous>, transform_indices = @transform_2, window_bounds = array<i64: 1, 32>}, {pipeline_mode = #tpu.pipeline_mode<synchronous>, transform_indices = @transform_3, window_bounds = array<i64: 32, 32>}, {pipeline_mode = #tpu.pipeline_mode<synchronous>, transform_indices = @transform_4, window_bounds = array<i64: 32, 32>}, {pipeline_mode = #tpu.pipeline_mode<synchronous>, transform_indices = @transform_5, window_bounds = array<i64: 1, 32>}, {pipeline_mode = #tpu.pipeline_mode<synchronous>, transform_indices = @transform_6, window_bounds = array<i64: 32, 96>}, {pipeline_mode = #tpu.pipeline_mode<synchronous>, transform_indices = @transform_7, window_bounds = array<i64: 32, 96>}, {pipeline_mode = #tpu.pipeline_mode<synchronous>, transform_indices = @transform_8, window_bounds = array<i64: 32, 96>}, {pipeline_mode = #tpu.pipeline_mode<synchronous>, transform_indices = @transform_9, window_bounds = array<i64: 1, 96>}, {pipeline_mode = #tpu.pipeline_mode<synchronous>, transform_indices = @transform_10, window_bounds = array<i64: 1, 96>}, {pipeline_mode = #tpu.pipeline_mode<synchronous>, transform_indices = @transform_11, window_bounds = array<i64: 1, 96>}, {transform_indices = @transform_12, window_bounds = array<i64: 8, 96>}]} {
    %c0 = arith.constant 0 : index
    %c0_0 = arith.constant 0 : index
    %0 = vector.load %arg1[%c0, %c0_0] : memref<8x32xf32, #tpu.memory_space<vmem>>, vector<8x32xf32>
    %c0_1 = arith.constant 0 : index
    %c0_2 = arith.constant 0 : index
    %1 = vector.load %arg2[%c0_1, %c0_2] : memref<32x32xf32, #tpu.memory_space<vmem>>, vector<32x32xf32>
    %cst = arith.constant dense<0.000000e+00> : vector<8x32xf32>
    %2 = tpu.matmul %0, %1, %cst {dimension_numbers = #tpu.dot_dimension_numbers<[1], [0], [0], [1], [0, 0, 1, 1], [], []>} : vector<8x32xf32>, vector<32x32xf32>, vector<8x32xf32> -> vector<8x32xf32>
    %c0_3 = arith.constant 0 : index
    %c0_4 = arith.constant 0 : index
    %3 = vector.load %arg3[%c0_3, %c0_4] : memref<1x32xf32, #tpu.memory_space<vmem>>, vector<1x32xf32>
    %4 = vector.broadcast %3 : vector<1x32xf32> to vector<8x32xf32>
    %5 = arith.addf %2, %4 : vector<8x32xf32>
    %cst_5 = arith.constant 0.000000e+00 : f32
    %6 = vector.broadcast %cst_5 : f32 to vector<8x32xf32>
    %7 = arith.maximumf %5, %6 : vector<8x32xf32>
    %c0_6 = arith.constant 0 : index
    %c0_7 = arith.constant 0 : index
    %8 = vector.load %arg4[%c0_6, %c0_7] : memref<32x32xf32, #tpu.memory_space<vmem>>, vector<32x32xf32>
    %cst_8 = arith.constant dense<0.000000e+00> : vector<8x32xf32>
    %9 = tpu.matmul %0, %8, %cst_8 {dimension_numbers = #tpu.dot_dimension_numbers<[1], [0], [0], [1], [0, 0, 1, 1], [], []>} : vector<8x32xf32>, vector<32x32xf32>, vector<8x32xf32> -> vector<8x32xf32>
    %c0_9 = arith.constant 0 : index
    %c0_10 = arith.constant 0 : index
    %10 = vector.load %arg5[%c0_9, %c0_10] : memref<32x32xf32, #tpu.memory_space<vmem>>, vector<32x32xf32>
    %cst_11 = arith.constant dense<0.000000e+00> : vector<8x32xf32>
    %11 = tpu.matmul %7, %10, %cst_11 {dimension_numbers = #tpu.dot_dimension_numbers<[1], [0], [0], [1], [0, 0, 1, 1], [], []>} : vector<8x32xf32>, vector<32x32xf32>, vector<8x32xf32> -> vector<8x32xf32>
    %12 = arith.addf %9, %11 : vector<8x32xf32>
    %c0_12 = arith.constant 0 : index
    %c0_13 = arith.constant 0 : index
    %13 = vector.load %arg6[%c0_12, %c0_13] : memref<1x32xf32, #tpu.memory_space<vmem>>, vector<1x32xf32>
    %14 = vector.broadcast %13 : vector<1x32xf32> to vector<8x32xf32>
    %15 = arith.addf %12, %14 : vector<8x32xf32>
    %cst_14 = arith.constant 0.000000e+00 : f32
    %16 = vector.broadcast %cst_14 : f32 to vector<8x32xf32>
    %17 = arith.maximumf %15, %16 : vector<8x32xf32>
    %c0_15 = arith.constant 0 : index
    %c0_16 = arith.constant 0 : index
    %18 = vector.load %arg7[%c0_15, %c0_16] : memref<32x96xf32, #tpu.memory_space<vmem>>, vector<32x96xf32>
    %cst_17 = arith.constant dense<0.000000e+00> : vector<8x96xf32>
    %19 = tpu.matmul %0, %18, %cst_17 {dimension_numbers = #tpu.dot_dimension_numbers<[1], [0], [0], [1], [0, 0, 1, 1], [], []>} : vector<8x32xf32>, vector<32x96xf32>, vector<8x96xf32> -> vector<8x96xf32>
    %c0_18 = arith.constant 0 : index
    %c0_19 = arith.constant 0 : index
    %20 = vector.load %arg8[%c0_18, %c0_19] : memref<32x96xf32, #tpu.memory_space<vmem>>, vector<32x96xf32>
    %cst_20 = arith.constant dense<0.000000e+00> : vector<8x96xf32>
    %21 = tpu.matmul %7, %20, %cst_20 {dimension_numbers = #tpu.dot_dimension_numbers<[1], [0], [0], [1], [0, 0, 1, 1], [], []>} : vector<8x32xf32>, vector<32x96xf32>, vector<8x96xf32> -> vector<8x96xf32>
    %22 = arith.addf %19, %21 : vector<8x96xf32>
    %c0_21 = arith.constant 0 : index
    %c0_22 = arith.constant 0 : index
    %23 = vector.load %arg9[%c0_21, %c0_22] : memref<32x96xf32, #tpu.memory_space<vmem>>, vector<32x96xf32>
    %cst_23 = arith.constant dense<0.000000e+00> : vector<8x96xf32>
    %24 = tpu.matmul %17, %23, %cst_23 {dimension_numbers = #tpu.dot_dimension_numbers<[1], [0], [0], [1], [0, 0, 1, 1], [], []>} : vector<8x32xf32>, vector<32x96xf32>, vector<8x96xf32> -> vector<8x96xf32>
    %25 = arith.addf %22, %24 : vector<8x96xf32>
    %c0_24 = arith.constant 0 : index
    %c0_25 = arith.constant 0 : index
    %26 = vector.load %arg10[%c0_24, %c0_25] : memref<1x96xf32, #tpu.memory_space<vmem>>, vector<1x96xf32>
    %27 = vector.broadcast %26 : vector<1x96xf32> to vector<8x96xf32>
    %28 = arith.addf %25, %27 : vector<8x96xf32>
    %c0_26 = arith.constant 0 : index
    %c0_27 = arith.constant 0 : index
    %29 = vector.load %arg11[%c0_26, %c0_27] : memref<1x96xf32, #tpu.memory_space<vmem>>, vector<1x96xf32>
    %c0_28 = arith.constant 0 : index
    %c0_29 = arith.constant 0 : index
    %30 = vector.load %arg12[%c0_28, %c0_29] : memref<1x96xf32, #tpu.memory_space<vmem>>, vector<1x96xf32>
    %cst_30 = arith.constant dense<0.000000e+00> : vector<8xf32>
    %31 = vector.multi_reduction <add>, %28, %cst_30 [1] : vector<8x96xf32> to vector<8xf32>
    %32 = vector.shape_cast %31 : vector<8xf32> to vector<8x1xf32>
    %cst_31 = arith.constant 9.600000e+01 : f32
    %33 = vector.broadcast %cst_31 : f32 to vector<8x1xf32>
    %34 = arith.divf %32, %33 : vector<8x1xf32>
    %35 = vector.broadcast %34 : vector<8x1xf32> to vector<8x96xf32>
    %36 = arith.subf %28, %35 : vector<8x96xf32>
    %37 = arith.mulf %36, %36 : vector<8x96xf32>
    %cst_32 = arith.constant dense<0.000000e+00> : vector<8xf32>
    %38 = vector.multi_reduction <add>, %37, %cst_32 [1] : vector<8x96xf32> to vector<8xf32>
    %39 = vector.shape_cast %38 : vector<8xf32> to vector<8x1xf32>
    %cst_33 = arith.constant 9.600000e+01 : f32
    %40 = vector.broadcast %cst_33 : f32 to vector<8x1xf32>
    %41 = arith.divf %39, %40 : vector<8x1xf32>
    %42 = vector.broadcast %34 : vector<8x1xf32> to vector<8x96xf32>
    %43 = arith.subf %28, %42 : vector<8x96xf32>
    %cst_34 = arith.constant 9.99999974E-6 : f32
    %44 = vector.broadcast %cst_34 : f32 to vector<8x1xf32>
    %45 = arith.addf %41, %44 : vector<8x1xf32>
    %46 = math.rsqrt %45 : vector<8x1xf32>
    %47 = vector.broadcast %46 : vector<8x1xf32> to vector<8x96xf32>
    %48 = arith.mulf %43, %47 : vector<8x96xf32>
    %49 = vector.broadcast %29 : vector<1x96xf32> to vector<8x96xf32>
    %50 = arith.mulf %48, %49 : vector<8x96xf32>
    %51 = vector.broadcast %30 : vector<1x96xf32> to vector<8x96xf32>
    %52 = arith.addf %50, %51 : vector<8x96xf32>
    %53 = math.tanh %52 : vector<8x96xf32>
    %c0_35 = arith.constant 0 : index
    %c0_36 = arith.constant 0 : index
    %54 = vector.load %arg13[%c0_35, %c0_36] : memref<8x96xf32, #tpu.memory_space<vmem>>, vector<8x96xf32>
    tpu.vector_store %arg13[%c0_35, %c0_36], %53 {strides = array<i32>} : memref<8x96xf32, #tpu.memory_space<vmem>>, vector<8x96xf32>,
    return
  }
  func.func @transform_0(%arg0: i32) -> (i32, i32) {
    %c0_i32 = arith.constant 0 : i32
    %c0_i32_0 = arith.constant 0 : i32
    return %arg0, %c0_i32 : i32, i32
  }
  func.func @transform_1(%arg0: i32) -> (i32, i32) {
    %c0_i32 = arith.constant 0 : i32
    %c0_i32_0 = arith.constant 0 : i32
    %c0_i32_1 = arith.constant 0 : i32
    return %c0_i32, %c0_i32_0 : i32, i32
  }
  func.func @transform_2(%arg0: i32) -> (i32, i32) {
    %c0_i32 = arith.constant 0 : i32
    %c0_i32_0 = arith.constant 0 : i32
    %c0_i32_1 = arith.constant 0 : i32
    return %c0_i32, %c0_i32_0 : i32, i32
  }
  func.func @transform_3(%arg0: i32) -> (i32, i32) {
    %c0_i32 = arith.constant 0 : i32
    %c0_i32_0 = arith.constant 0 : i32
    %c0_i32_1 = arith.constant 0 : i32
    return %c0_i32, %c0_i32_0 : i32, i32
  }
  func.func @transform_4(%arg0: i32) -> (i32, i32) {
    %c0_i32 = arith.constant 0 : i32
    %c0_i32_0 = arith.constant 0 : i32
    %c0_i32_1 = arith.constant 0 : i32
    return %c0_i32, %c0_i32_0 : i32, i32
  }
  func.func @transform_5(%arg0: i32) -> (i32, i32) {
    %c0_i32 = arith.constant 0 : i32
    %c0_i32_0 = arith.constant 0 : i32
    %c0_i32_1 = arith.constant 0 : i32
    return %c0_i32, %c0_i32_0 : i32, i32
  }
  func.func @transform_6(%arg0: i32) -> (i32, i32) {
    %c0_i32 = arith.constant 0 : i32
    %c0_i32_0 = arith.constant 0 : i32
    %c0_i32_1 = arith.constant 0 : i32
    return %c0_i32, %c0_i32_0 : i32, i32
  }
  func.func @transform_7(%arg0: i32) -> (i32, i32) {
    %c0_i32 = arith.constant 0 : i32
    %c0_i32_0 = arith.constant 0 : i32
    %c0_i32_1 = arith.constant 0 : i32
    return %c0_i32, %c0_i32_0 : i32, i32
  }
  func.func @transform_8(%arg0: i32) -> (i32, i32) {
    %c0_i32 = arith.constant 0 : i32
    %c0_i32_0 = arith.constant 0 : i32
    %c0_i32_1 = arith.constant 0 : i32
    return %c0_i32, %c0_i32_0 : i32, i32
  }
  func.func @transform_9(%arg0: i32) -> (i32, i32) {
    %c0_i32 = arith.constant 0 : i32
    %c0_i32_0 = arith.constant 0 : i32
    %c0_i32_1 = arith.constant 0 : i32
    return %c0_i32, %c0_i32_0 : i32, i32
  }
  func.func @transform_10(%arg0: i32) -> (i32, i32) {
    %c0_i32 = arith.constant 0 : i32
    %c0_i32_0 = arith.constant 0 : i32
    %c0_i32_1 = arith.constant 0 : i32
    return %c0_i32, %c0_i32_0 : i32, i32
  }
  func.func @transform_11(%arg0: i32) -> (i32, i32) {
    %c0_i32 = arith.constant 0 : i32
    %c0_i32_0 = arith.constant 0 : i32
    %c0_i32_1 = arith.constant 0 : i32
    return %c0_i32, %c0_i32_0 : i32, i32
  }
  func.func @transform_12(%arg0: i32) -> (i32, i32) {
    %c0_i32 = arith.constant 0 : i32
    %c0_i32_0 = arith.constant 0 : i32
    return %arg0, %c0_i32 : i32, i32
  }
}

</mosaic_0001>

<llo_original>
// kernel: tpu_custom_call.1
$region0: #{tpu_custom_call.1}
  #allocation0 [shape = 'u32[]', space=smem, size = 0x4, offset = 0x4, fixed_abs, tag = 'smem constant byte address 0x4 - core index']
  #allocation1 [shape = 'u32[144,128]{1,0:T(1,128)}', space=vmem, size = 0x12000, scoped, tag = 'internal scratch']
  %s0 = inlined_call_operand.hbm [shape: f32[16,32], index: 0, kind: input, shape index: {}]
  %s1 = inlined_call_operand.hbm [shape: f32[32,32], index: 1, kind: input, shape index: {}]
  %s2 = inlined_call_operand.vmem [shape: f32[1,32], index: 2, kind: input, shape index: {}]
  %s3 = inlined_call_operand.hbm [shape: f32[32,32], index: 3, kind: input, shape index: {}]
  %s4 = inlined_call_operand.hbm [shape: f32[32,32], index: 4, kind: input, shape index: {}]
  %s5 = inlined_call_operand.vmem [shape: f32[1,32], index: 5, kind: input, shape index: {}]
  %s6 = inlined_call_operand.hbm [shape: f32[32,96], index: 6, kind: input, shape index: {}]
  %s7 = inlined_call_operand.hbm [shape: f32[32,96], index: 7, kind: input, shape index: {}]
  %s8 = inlined_call_operand.hbm [shape: f32[32,96], index: 8, kind: input, shape index: {}]
  %s9 = inlined_call_operand.vmem [shape: f32[1,96], index: 9, kind: input, shape index: {}]
  %s10 = inlined_call_operand.vmem [shape: f32[1,96], index: 10, kind: input, shape index: {}]
  %s11 = inlined_call_operand.vmem [shape: f32[1,96], index: 11, kind: input, shape index: {}]
  %s12 = inlined_call_operand.hbm [shape: f32[16,96], index: 12, kind: output, shape index: {}]
  %s13 = sld [smem:[#allocation0]]
  $region109: #{tpu_custom_call.1} parent=0
    _
  %s15 = ssub.s32 1, %s13
  %s16 = scalar_select 0, %s15, %s13
  $region1: #{tpu_custom_call.1} parent=0
    #allocation2 [shape = 'u8[8192]{0}', space=vmem, size = 0x2000, scoped, tag = 'input window, operand 0']
    #allocation3 [shape = 's32[2]{0}', space=sflag, size = 0x8, scoped, tag = 'scoped memory for tpu_custom_call.1']
    #allocation4 [shape = 's32[2]{0}', space=sflag, size = 0x8, scoped, tag = 'scoped memory for tpu_custom_call.1']
    #allocation5 [shape = 'u8[16384]{0}', space=vmem, size = 0x4000, scoped, tag = 'input window, operand 1, single buffered']
    #allocation6 [shape = 's32[1]{0}', space=sflag, size = 0x4, scoped, tag = 'scoped memory for tpu_custom_call.1']
    #allocation7 [shape = 'u8[16384]{0}', space=vmem, size = 0x4000, scoped, tag = 'input window, operand 3, single buffered']
    #allocation8 [shape = 'u8[16384]{0}', space=vmem, size = 0x4000, scoped, tag = 'input window, operand 4, single buffered']
    #allocation9 [shape = 's32[1]{0}', space=sflag, size = 0x4, scoped, tag = 'scoped memory for tpu_custom_call.1']
    #allocation10 [shape = 'u8[16384]{0}', space=vmem, size = 0x4000, scoped, tag = 'input window, operand 6, single buffered']
    #allocation11 [shape = 'u8[16384]{0}', space=vmem, size = 0x4000, scoped, tag = 'input window, operand 7, single buffered']
    #allocation12 [shape = 's32[1]{0}', space=sflag, size = 0x4, scoped, tag = 'scoped memory for tpu_custom_call.1']
    #allocation13 [shape = 'u8[16384]{0}', space=vmem, size = 0x4000, scoped, tag = 'input window, operand 8, single buffered']
    #allocation14 [shape = 'u8[8192]{0}', space=vmem, size = 0x2000, scoped, tag = 'output window, operand 0']
    %17 = vsyncpa [#allocation3], 0
    %s18 = scalar_lea.sflag [#allocation3], 1
    %19 = vsyncpa %s18, 0
    %20 = vsyncpa [#allocation6], 0
    %21 = vsyncpa [#allocation9], 0
    %22 = vsyncpa [#allocation12], 0
    %23 = vsyncpa [#allocation4], 0
    %s24 = scalar_lea.sflag [#allocation4], 1
    %25 = vsyncpa %s24, 0
    loop: start=0, step=1, limit=4
    $region2: #{tpu_custom_call.1} parent=1 // loop_pre_header
      _
    $region3: #{tpu_custom_call.1} parent=1 // loop_header
      %s27 = sphi 0, %s31
      %p28 = scmp.ge.s32.totalorder %s27, 4
      %s37 = sphi 0, %s39
      %s40 = sphi 0, %s37
      %s41 = sphi 0, %s40
      %s57 = sphi 0, %s41
      %s61 = sphi 0, %s61
      %s63 = sphi 0, %s61
      %s64 = sphi 0, %s63
      %s78 = sphi 0, %s64
      %s82 = sphi 0, %s82
      %s84 = sphi 0, %s82
      %s85 = sphi 0, %s84
      %s99 = sphi 0, %s85
      %s103 = sphi 0, %s103
      %s105 = sphi 0, %s103
      %s106 = sphi 0, %s105
      %s120 = sphi 0, %s106
      %s124 = sphi 0, %s124
      %s126 = sphi 0, %s124
      %s127 = sphi 0, %s126
      %s141 = sphi 0, %s127
      %s145 = sphi 0, %s145
      %s147 = sphi 0, %s145
      %s148 = sphi 0, %s147
      %s162 = sphi 0, %s148
      %s166 = sphi 0, %s166
      %s168 = sphi 0, %s166
      %s169 = sphi 0, %s168
      %s183 = sphi 0, %s169
      %s187 = sphi 0, %s187
      %s189 = sphi 0, %s187
      %s190 = sphi 0, %s189
      %s204 = sphi 0, %s190
      %s208 = sphi 0, %s208
      %s210 = sphi 0, %s208
      %s211 = sphi 0, %s210
      %s225 = sphi 0, %s211
      %s229 = sphi 0, %s229
      %s231 = sphi 0, %s229
      %s232 = sphi 0, %s231
      %s246 = sphi 0, %s232
      %s250 = sphi 0, %s250
      %s252 = sphi 0, %s250
      %s253 = sphi 0, %s252
      %s267 = sphi 0, %s253
      %s271 = sphi 0, %s271
      %s273 = sphi 0, %s271
      %s274 = sphi 0, %s273
      %s288 = sphi 0, %s274
      %s294 = sphi 0, %s296
      %s297 = sphi 0, %s294
      %s298 = sphi 0, %s297
      %s314 = sphi 0, %s298
    $region4: #{tpu_custom_call.1} parent=1 // loop_header_branch
      %30 = sbr.rel (%p28) target = $region8
    $region5: #{tpu_custom_call.1} parent=1 // loop_body
      %s32 = ssub.s32 %s27, 1
      %s33 = ssub.s32 %s27, 2
      %s34 = sadd.s32 %s27, 1
      %s35 = ssub.s32 %s27, %s34
      %p36 = scmp.eq.s32.totalorder %s35, 0
      %s38 = sadd.s32 %s37, 1
      %s39 = scalar_select %p36, %s37, %s38
      %p42 = pneg %p36
      %p43 = scmp.eq.s32.totalorder %s27, 1
      %p44 = por %p42, %p43
      %p45 = scmp.ne.s32.totalorder %s37, %s40
      %p46 = scmp.eq.s32.totalorder %s27, 0
      %p47 = por %p45, %p46
      %p48 = scmp.ne.s32.totalorder %s37, %s40
      %p49 = scmp.eq.s32.totalorder %s32, 1
      %p50 = por %p48, %p49
      %p51 = scmp.ne.s32.totalorder %s40, %s41
      %p52 = scmp.eq.s32.totalorder %s32, 0
      %p53 = por %p51, %p52
      %p54 = scmp.ne.s32.totalorder %s40, %s41
      %p55 = scmp.eq.s32.totalorder %s33, 1
      %p56 = por %p54, %p55
      %p58 = scmp.ne.s32.totalorder %s41, %s57
      %p59 = scmp.eq.s32.totalorder %s33, 0
      %p60 = por %p58, %p59
      %s62 = sadd.s32 %s61, 1
      %p65 = scmp.eq.s32.totalorder %s27, 1
      %p66 = scmp.ne.s32.totalorder %s61, %s63
      %p67 = scmp.eq.s32.totalorder %s27, 0
      %p68 = por %p66, %p67
      %p69 = scmp.ne.s32.totalorder %s61, %s63
      %p70 = scmp.eq.s32.totalorder %s32, 1
      %p71 = por %p69, %p70
      %p72 = scmp.ne.s32.totalorder %s63, %s64
      %p73 = scmp.eq.s32.totalorder %s32, 0
      %p74 = por %p72, %p73
      %p75 = scmp.ne.s32.totalorder %s63, %s64
      %p76 = scmp.eq.s32.totalorder %s33, 1
      %p77 = por %p75, %p76
      %p79 = scmp.ne.s32.totalorder %s64, %s78
      %p80 = scmp.eq.s32.totalorder %s33, 0
      %p81 = por %p79, %p80
      %s83 = sadd.s32 %s82, 1
      %p86 = scmp.eq.s32.totalorder %s27, 1
      %p87 = scmp.ne.s32.totalorder %s82, %s84
      %p88 = scmp.eq.s32.totalorder %s27, 0
      %p89 = por %p87, %p88
      %p90 = scmp.ne.s32.totalorder %s82, %s84
      %p91 = scmp.eq.s32.totalorder %s32, 1
      %p92 = por %p90, %p91
      %p93 = scmp.ne.s32.totalorder %s84, %s85
      %p94 = scmp.eq.s32.totalorder %s32, 0
      %p95 = por %p93, %p94
      %p96 = scmp.ne.s32.totalorder %s84, %s85
      %p97 = scmp.eq.s32.totalorder %s33, 1
      %p98 = por %p96, %p97
      %p100 = scmp.ne.s32.totalorder %s85, %s99
      %p101 = scmp.eq.s32.totalorder %s33, 0
      %p102 = por %p100, %p101
      %s104 = sadd.s32 %s103, 1
      %p107 = scmp.eq.s32.totalorder %s27, 1
      %p108 = scmp.ne.s32.totalorder %s103, %s105
      %p109 = scmp.eq.s32.totalorder %s27, 0
      %p110 = por %p108, %p109
      %p111 = scmp.ne.s32.totalorder %s103, %s105
      %p112 = scmp.eq.s32.totalorder %s32, 1
      %p113 = por %p111, %p112
      %p114 = scmp.ne.s32.totalorder %s105, %s106
      %p115 = scmp.eq.s32.totalorder %s32, 0
      %p116 = por %p114, %p115
      %p117 = scmp.ne.s32.totalorder %s105, %s106
      %p118 = scmp.eq.s32.totalorder %s33, 1
      %p119 = por %p117, %p118
      %p121 = scmp.ne.s32.totalorder %s106, %s120
      %p122 = scmp.eq.s32.totalorder %s33, 0
      %p123 = por %p121, %p122
      %s125 = sadd.s32 %s124, 1
      %p128 = scmp.eq.s32.totalorder %s27, 1
      %p129 = scmp.ne.s32.totalorder %s124, %s126
      %p130 = scmp.eq.s32.totalorder %s27, 0
      %p131 = por %p129, %p130
      %p132 = scmp.ne.s32.totalorder %s124, %s126
      %p133 = scmp.eq.s32.totalorder %s32, 1
      %p134 = por %p132, %p133
      %p135 = scmp.ne.s32.totalorder %s126, %s127
      %p136 = scmp.eq.s32.totalorder %s32, 0
      %p137 = por %p135, %p136
      %p138 = scmp.ne.s32.totalorder %s126, %s127
      %p139 = scmp.eq.s32.totalorder %s33, 1
      %p140 = por %p138, %p139
      %p142 = scmp.ne.s32.totalorder %s127, %s141
      %p143 = scmp.eq.s32.totalorder %s33, 0
      %p144 = por %p142, %p143
      %s146 = sadd.s32 %s145, 1
      %p149 = scmp.eq.s32.totalorder %s27, 1
      %p150 = scmp.ne.s32.totalorder %s145, %s147
      %p151 = scmp.eq.s32.totalorder %s27, 0
      %p152 = por %p150, %p151
      %p153 = scmp.ne.s32.totalorder %s145, %s147
      %p154 = scmp.eq.s32.totalorder %s32, 1
      %p155 = por %p153, %p154
      %p156 = scmp.ne.s32.totalorder %s147, %s148
      %p157 = scmp.eq.s32.totalorder %s32, 0
      %p158 = por %p156, %p157
      %p159 = scmp.ne.s32.totalorder %s147, %s148
      %p160 = scmp.eq.s32.totalorder %s33, 1
      %p161 = por %p159, %p160
      %p163 = scmp.ne.s32.totalorder %s148, %s162
      %p164 = scmp.eq.s32.totalorder %s33, 0
      %p165 = por %p163, %p164
      %s167 = sadd.s32 %s166, 1
      %p170 = scmp.eq.s32.totalorder %s27, 1
      %p171 = scmp.ne.s32.totalorder %s166, %s168
      %p172 = scmp.eq.s32.totalorder %s27, 0
      %p173 = por %p171, %p172
      %p174 = scmp.ne.s32.totalorder %s166, %s168
      %p175 = scmp.eq.s32.totalorder %s32, 1
      %p176 = por %p174, %p175
      %p177 = scmp.ne.s32.totalorder %s168, %s169
      %p178 = scmp.eq.s32.totalorder %s32, 0
      %p179 = por %p177, %p178
      %p180 = scmp.ne.s32.totalorder %s168, %s169
      %p181 = scmp.eq.s32.totalorder %s33, 1
      %p182 = por %p180, %p181
      %p184 = scmp.ne.s32.totalorder %s169, %s183
      %p185 = scmp.eq.s32.totalorder %s33, 0
      %p186 = por %p184, %p185
      %s188 = sadd.s32 %s187, 1
      %p191 = scmp.eq.s32.totalorder %s27, 1
      %p192 = scmp.ne.s32.totalorder %s187, %s189
      %p193 = scmp.eq.s32.totalorder %s27, 0
      %p194 = por %p192, %p193
      %p195 = scmp.ne.s32.totalorder %s187, %s189
      %p196 = scmp.eq.s32.totalorder %s32, 1
      %p197 = por %p195, %p196
      %p198 = scmp.ne.s32.totalorder %s189, %s190
      %p199 = scmp.eq.s32.totalorder %s32, 0
      %p200 = por %p198, %p199
      %p201 = scmp.ne.s32.totalorder %s189, %s190
      %p202 = scmp.eq.s32.totalorder %s33, 1
      %p203 = por %p201, %p202
      %p205 = scmp.ne.s32.totalorder %s190, %s204
      %p206 = scmp.eq.s32.totalorder %s33, 0
      %p207 = por %p205, %p206
      %s209 = sadd.s32 %s208, 1
      %p212 = scmp.eq.s32.totalorder %s27, 1
      %p213 = scmp.ne.s32.totalorder %s208, %s210
      %p214 = scmp.eq.s32.totalorder %s27, 0
      %p215 = por %p213, %p214
      %p216 = scmp.ne.s32.totalorder %s208, %s210
      %p217 = scmp.eq.s32.totalorder %s32, 1
      %p218 = por %p216, %p217
      %p219 = scmp.ne.s32.totalorder %s210, %s211
      %p220 = scmp.eq.s32.totalorder %s32, 0
      %p221 = por %p219, %p220
      %p222 = scmp.ne.s32.totalorder %s210, %s211
      %p223 = scmp.eq.s32.totalorder %s33, 1
      %p224 = por %p222, %p223
      %p226 = scmp.ne.s32.totalorder %s211, %s225
      %p227 = scmp.eq.s32.totalorder %s33, 0
      %p228 = por %p226, %p227
      %s230 = sadd.s32 %s229, 1
      %p233 = scmp.eq.s32.totalorder %s27, 1
      %p234 = scmp.ne.s32.totalorder %s229, %s231
      %p235 = scmp.eq.s32.totalorder %s27, 0
      %p236 = por %p234, %p235
      %p237 = scmp.ne.s32.totalorder %s229, %s231
      %p238 = scmp.eq.s32.totalorder %s32, 1
      %p239 = por %p237, %p238
      %p240 = scmp.ne.s32.totalorder %s231, %s232
      %p241 = scmp.eq.s32.totalorder %s32, 0
      %p242 = por %p240, %p241
      %p243 = scmp.ne.s32.totalorder %s231, %s232
      %p244 = scmp.eq.s32.totalorder %s33, 1
      %p245 = por %p243, %p244
      %p247 = scmp.ne.s32.totalorder %s232, %s246
      %p248 = scmp.eq.s32.totalorder %s33, 0
      %p249 = por %p247, %p248
      %s251 = sadd.s32 %s250, 1
      %p254 = scmp.eq.s32.totalorder %s27, 1
      %p255 = scmp.ne.s32.totalorder %s250, %s252
      %p256 = scmp.eq.s32.totalorder %s27, 0
      %p257 = por %p255, %p256
      %p258 = scmp.ne.s32.totalorder %s250, %s252
      %p259 = scmp.eq.s32.totalorder %s32, 1
      %p260 = por %p258, %p259
      %p261 = scmp.ne.s32.totalorder %s252, %s253
      %p262 = scmp.eq.s32.totalorder %s32, 0
      %p263 = por %p261, %p262
      %p264 = scmp.ne.s32.totalorder %s252, %s253
      %p265 = scmp.eq.s32.totalorder %s33, 1
      %p266 = por %p264, %p265
      %p268 = scmp.ne.s32.totalorder %s253, %s267
      %p269 = scmp.eq.s32.totalorder %s33, 0
      %p270 = por %p268, %p269
      %s272 = sadd.s32 %s271, 1
      %p275 = scmp.eq.s32.totalorder %s27, 1
      %p276 = scmp.ne.s32.totalorder %s271, %s273
      %p277 = scmp.eq.s32.totalorder %s27, 0
      %p278 = por %p276, %p277
      %p279 = scmp.ne.s32.totalorder %s271, %s273
      %p280 = scmp.eq.s32.totalorder %s32, 1
      %p281 = por %p279, %p280
      %p282 = scmp.ne.s32.totalorder %s273, %s274
      %p283 = scmp.eq.s32.totalorder %s32, 0
      %p284 = por %p282, %p283
      %p285 = scmp.ne.s32.totalorder %s273, %s274
      %p286 = scmp.eq.s32.totalorder %s33, 1
      %p287 = por %p285, %p286
      %p289 = scmp.ne.s32.totalorder %s274, %s288
      %p290 = scmp.eq.s32.totalorder %s33, 0
      %p291 = por %p289, %p290
      %s292 = ssub.s32 %s27, %s34
      %p293 = scmp.eq.s32.totalorder %s292, 0
      %s295 = sadd.s32 %s294, 1
      %s296 = scalar_select %p293, %s294, %s295
      %p299 = pneg %p293
      %p300 = scmp.eq.s32.totalorder %s27, 1
      %p301 = por %p299, %p300
      %p302 = scmp.ne.s32.totalorder %s294, %s297
      %p303 = scmp.eq.s32.totalorder %s27, 0
      %p304 = por %p302, %p303
      %p305 = scmp.ne.s32.totalorder %s294, %s297
      %p306 = scmp.eq.s32.totalorder %s32, 1
      %p307 = por %p305, %p306
      %p308 = scmp.ne.s32.totalorder %s297, %s298
      %p309 = scmp.eq.s32.totalorder %s32, 0
      %p310 = por %p308, %p309
      %p311 = scmp.ne.s32.totalorder %s297, %s298
      %p312 = scmp.eq.s32.totalorder %s33, 1
      %p313 = por %p311, %p312
      %p315 = scmp.ne.s32.totalorder %s298, %s314
      %p316 = scmp.eq.s32.totalorder %s33, 0
      %p317 = por %p315, %p316
      %p318 = scmp.le.s32.totalorder 1, %s27
      %p319 = scmp.lt.s32.totalorder %s27, 3
      %p320 = pnand %p318, %p319
      %p321 = pneg %p320
      // Predicated region
      $region9: #{tpu_custom_call.1} parent=5 // pred_check
        _
      $region10: #{tpu_custom_call.1} parent=5 // pred_check_branch
        %323 = sbr.rel (%p320) target = $region12
      $region11: #{tpu_custom_call.1} parent=5 // pred_region
        %s324 = ssub.s32 %s27, 1
        // Predicated region
        $region13: #{tpu_custom_call.1} parent=11 // pred_check
          %p325 = pneg %p74
        $region14: #{tpu_custom_call.1} parent=11 // pred_check_branch
          %327 = sbr.rel (%p325) target = $region16
        $region15: #{tpu_custom_call.1} parent=11 // pred_region
          %s329 = ssub.s32 512, 512
          %330 = vsyncadd [#allocation6], %s329
          %s331 = sshll.u32 [#allocation5], 4
          %s332 = int_to_ptr.vmem [resolvable:$true] %s331
          %337 = dma.hbm_to_vmem [thread:$0]  %s1, 512, %s332, [#allocation6], 128, 128, 8
        $region16: #{tpu_custom_call.1} parent=11 // pred_fallthru
          _
        // Predicated region
        $region17: #{tpu_custom_call.1} parent=11 // pred_check
          %p338 = pneg %p95
        $region18: #{tpu_custom_call.1} parent=11 // pred_check_branch
          %340 = sbr.rel (%p338) target = $region20
        $region19: #{tpu_custom_call.1} parent=11 // pred_region
          _
        $region20: #{tpu_custom_call.1} parent=11 // pred_fallthru
          _
        // Predicated region
        $region21: #{tpu_custom_call.1} parent=11 // pred_check
          %p341 = pneg %p116
        $region22: #{tpu_custom_call.1} parent=11 // pred_check_branch
          %343 = sbr.rel (%p341) target = $region24
        $region23: #{tpu_custom_call.1} parent=11 // pred_region
          %s345 = ssub.s32 512, 512
          %346 = vsyncadd [#allocation6], %s345
          %s347 = sshll.u32 [#allocation7], 4
          %s348 = int_to_ptr.vmem [resolvable:$true] %s347
          %353 = dma.hbm_to_vmem [thread:$0]  %s3, 512, %s348, [#allocation6], 128, 128, 8
        $region24: #{tpu_custom_call.1} parent=11 // pred_fallthru
          _
        // Predicated region
        $region25: #{tpu_custom_call.1} parent=11 // pred_check
          %p354 = pneg %p137
        $region26: #{tpu_custom_call.1} parent=11 // pred_check_branch
          %356 = sbr.rel (%p354) target = $region28
        $region27: #{tpu_custom_call.1} parent=11 // pred_region
          %s358 = ssub.s32 512, 512
          %359 = vsyncadd [#allocation9], %s358
          %s360 = sshll.u32 [#allocation8], 4
          %s361 = int_to_ptr.vmem [resolvable:$true] %s360
          %366 = dma.hbm_to_vmem [thread:$0]  %s4, 512, %s361, [#allocation9], 128, 128, 8
        $region28: #{tpu_custom_call.1} parent=11 // pred_fallthru
          _
        // Predicated region
        $region29: #{tpu_custom_call.1} parent=11 // pred_check
          %p367 = pneg %p158
        $region30: #{tpu_custom_call.1} parent=11 // pred_check_branch
          %369 = sbr.rel (%p367) target = $region32
        $region31: #{tpu_custom_call.1} parent=11 // pred_region
          _
        $region32: #{tpu_custom_call.1} parent=11 // pred_fallthru
          _
        // Predicated region
        $region33: #{tpu_custom_call.1} parent=11 // pred_check
          %p370 = pneg %p179
        $region34: #{tpu_custom_call.1} parent=11 // pred_check_branch
          %372 = sbr.rel (%p370) target = $region36
        $region35: #{tpu_custom_call.1} parent=11 // pred_region
          %s374 = ssub.s32 512, 512
          %375 = vsyncadd [#allocation9], %s374
          %s376 = sshll.u32 [#allocation10], 4
          %s377 = int_to_ptr.vmem [resolvable:$true] %s376
          %382 = dma.hbm_to_vmem [thread:$0]  %s6, 512, %s377, [#allocation9], 128, 128, 8
        $region36: #{tpu_custom_call.1} parent=11 // pred_fallthru
          _
        // Predicated region
        $region37: #{tpu_custom_call.1} parent=11 // pred_check
          %p383 = pneg %p200
        $region38: #{tpu_custom_call.1} parent=11 // pred_check_branch
          %385 = sbr.rel (%p383) target = $region40
        $region39: #{tpu_custom_call.1} parent=11 // pred_region
          %s387 = ssub.s32 512, 512
          %388 = vsyncadd [#allocation12], %s387
          %s389 = sshll.u32 [#allocation11], 4
          %s390 = int_to_ptr.vmem [resolvable:$true] %s389
          %395 = dma.hbm_to_vmem [thread:$0]  %s7, 512, %s390, [#allocation12], 128, 128, 8
        $region40: #{tpu_custom_call.1} parent=11 // pred_fallthru
          _
        // Predicated region
        $region41: #{tpu_custom_call.1} parent=11 // pred_check
          %p396 = pneg %p221
        $region42: #{tpu_custom_call.1} parent=11 // pred_check_branch
          %398 = sbr.rel (%p396) target = $region44
        $region43: #{tpu_custom_call.1} parent=11 // pred_region
          %s400 = ssub.s32 512, 512
          %401 = vsyncadd [#allocation12], %s400
          %s402 = sshll.u32 [#allocation13], 4
          %s403 = int_to_ptr.vmem [resolvable:$true] %s402
          %408 = dma.hbm_to_vmem [thread:$0]  %s8, 512, %s403, [#allocation12], 128, 128, 8
        $region44: #{tpu_custom_call.1} parent=11 // pred_fallthru
          _
        // Predicated region
        $region45: #{tpu_custom_call.1} parent=11 // pred_check
          %p409 = pneg %p242
        $region46: #{tpu_custom_call.1} parent=11 // pred_check_branch
          %411 = sbr.rel (%p409) target = $region48
        $region47: #{tpu_custom_call.1} parent=11 // pred_region
          _
        $region48: #{tpu_custom_call.1} parent=11 // pred_fallthru
          _
        // Predicated region
        $region49: #{tpu_custom_call.1} parent=11 // pred_check
          %p412 = pneg %p263
        $region50: #{tpu_custom_call.1} parent=11 // pred_check_branch
          %414 = sbr.rel (%p412) target = $region52
        $region51: #{tpu_custom_call.1} parent=11 // pred_region
          _
        $region52: #{tpu_custom_call.1} parent=11 // pred_fallthru
          _
        // Predicated region
        $region53: #{tpu_custom_call.1} parent=11 // pred_check
          %p415 = pneg %p284
        $region54: #{tpu_custom_call.1} parent=11 // pred_check_branch
          %417 = sbr.rel (%p415) target = $region56
        $region55: #{tpu_custom_call.1} parent=11 // pred_region
          _
        $region56: #{tpu_custom_call.1} parent=11 // pred_fallthru
          _
      $region12: #{tpu_custom_call.1} parent=5 // pred_fallthru
        _
      %p418 = scmp.lt.s32.totalorder %s27, 2
      // Predicated region
      $region57: #{tpu_custom_call.1} parent=5 // pred_check
        %p419 = pneg %p418
      $region58: #{tpu_custom_call.1} parent=5 // pred_check_branch
        %421 = sbr.rel (%p419) target = $region60
      $region59: #{tpu_custom_call.1} parent=5 // pred_region
        // Predicated region
        $region61: #{tpu_custom_call.1} parent=59 // pred_check
          %p422 = pneg %p47
        $region62: #{tpu_custom_call.1} parent=59 // pred_check_branch
          %424 = sbr.rel (%p422) target = $region64
        $region63: #{tpu_custom_call.1} parent=59 // pred_region
          %s425 = sand.u32 %s37, 1
          %s426 = scalar_lea.sflag [#allocation3], %s425
          %s427 = sand.u32 %s37, 1
          %s428 = smul.addr %s427, 8
          %s429 = scalar_lea.vmem [#allocation2], %s428
          %s431 = ssub.s32 128, 128
          %432 = vsyncadd %s426, %s431
          %s433 = smul.addr %s27, 128
          %s434 = scalar_lea.hbm %s0, %s433
          %s436 = sshll.u32 %s429, 4
          %s437 = int_to_ptr.vmem [resolvable:$true] %s436
          %439 = dma.hbm_to_vmem [thread:$0]  %s434, 128, %s437, %s426
        $region64: #{tpu_custom_call.1} parent=59 // pred_fallthru
          _
      $region60: #{tpu_custom_call.1} parent=5 // pred_fallthru
        _
      %p440 = scmp.le.s32.totalorder 1, %s27
      %p441 = scmp.lt.s32.totalorder %s27, 3
      %p442 = pnand %p440, %p441
      %p443 = pneg %p442
      // Predicated region
      $region65: #{tpu_custom_call.1} parent=5 // pred_check
        _
      $region66: #{tpu_custom_call.1} parent=5 // pred_check_branch
        %445 = sbr.rel (%p442) target = $region68
      $region67: #{tpu_custom_call.1} parent=5 // pred_region
        %s446 = ssub.s32 %s27, 1
        %s447 = sand.u32 %s40, 1
        %s448 = scalar_lea.sflag [#allocation3], %s447
        %s449 = sand.u32 %s40, 1
        %s450 = smul.addr %s449, 8
        %s451 = scalar_lea.vmem [#allocation2], %s450
        // Predicated region
        $region69: #{tpu_custom_call.1} parent=67 // pred_check
          %p452 = pneg %p53
        $region70: #{tpu_custom_call.1} parent=67 // pred_check_branch
          %454 = sbr.rel (%p452) target = $region72
        $region71: #{tpu_custom_call.1} parent=67 // pred_region
          %455 = dma.done %s448, 128
        $region72: #{tpu_custom_call.1} parent=67 // pred_fallthru
          _
        // Predicated region
        $region73: #{tpu_custom_call.1} parent=67 // pred_check
          %p456 = pneg %p74
        $region74: #{tpu_custom_call.1} parent=67 // pred_check_branch
          %458 = sbr.rel (%p456) target = $region76
        $region75: #{tpu_custom_call.1} parent=67 // pred_region
          %459 = dma.done [#allocation6], 512
        $region76: #{tpu_custom_call.1} parent=67 // pred_fallthru
          _
        // Predicated region
        $region77: #{tpu_custom_call.1} parent=67 // pred_check
          %p460 = pneg %p116
        $region78: #{tpu_custom_call.1} parent=67 // pred_check_branch
          %462 = sbr.rel (%p460) target = $region80
        $region79: #{tpu_custom_call.1} parent=67 // pred_region
          %463 = dma.done [#allocation6], 512
        $region80: #{tpu_custom_call.1} parent=67 // pred_fallthru
          _
        // Predicated region
        $region81: #{tpu_custom_call.1} parent=67 // pred_check
          %p464 = pneg %p137
        $region82: #{tpu_custom_call.1} parent=67 // pred_check_branch
          %466 = sbr.rel (%p464) target = $region84
        $region83: #{tpu_custom_call.1} parent=67 // pred_region
          %467 = dma.done [#allocation9], 512
        $region84: #{tpu_custom_call.1} parent=67 // pred_fallthru
          _
        // Predicated region
        $region85: #{tpu_custom_call.1} parent=67 // pred_check
          %p468 = pneg %p179
        $region86: #{tpu_custom_call.1} parent=67 // pred_check_branch
          %470 = sbr.rel (%p468) target = $region88
        $region87: #{tpu_custom_call.1} parent=67 // pred_region
          %471 = dma.done [#allocation9], 512
        $region88: #{tpu_custom_call.1} parent=67 // pred_fallthru
          _
        // Predicated region
        $region89: #{tpu_custom_call.1} parent=67 // pred_check
          %p472 = pneg %p200
        $region90: #{tpu_custom_call.1} parent=67 // pred_check_branch
          %474 = sbr.rel (%p472) target = $region92
        $region91: #{tpu_custom_call.1} parent=67 // pred_region
          %475 = dma.done [#allocation12], 512
        $region92: #{tpu_custom_call.1} parent=67 // pred_fallthru
          _
        // Predicated region
        $region93: #{tpu_custom_call.1} parent=67 // pred_check
          %p476 = pneg %p221
        $region94: #{tpu_custom_call.1} parent=67 // pred_check_branch
          %478 = sbr.rel (%p476) target = $region96
        $region95: #{tpu_custom_call.1} parent=67 // pred_region
          %479 = dma.done [#allocation12], 512
        $region96: #{tpu_custom_call.1} parent=67 // pred_fallthru
          _
        %s480 = sand.u32 %s40, 1
        %s481 = scalar_lea.sflag [#allocation3], %s480
        %s482 = sand.u32 %s40, 1
        %s483 = smul.addr %s482, 8
        %s484 = scalar_lea.vmem [#allocation2], %s483
        %p485 = pneg %p53
        %p486 = pneg %p50
        %p487 = pneg %p74
        %p488 = pneg %p71
        %p489 = pneg %p95
        %p490 = pneg %p92
        %p491 = pneg %p116
        %p492 = pneg %p113
        %p493 = pneg %p137
        %p494 = pneg %p134
        %p495 = pneg %p158
        %p496 = pneg %p155
        %p497 = pneg %p179
        %p498 = pneg %p176
        %p499 = pneg %p200
        %p500 = pneg %p197
        %p501 = pneg %p221
        %p502 = pneg %p218
        %p503 = pneg %p242
        %p504 = pneg %p239
        %p505 = pneg %p263
        %p506 = pneg %p260
        %p507 = pneg %p284
        %p508 = pneg %p281
        %p509 = pneg %p310
        %p510 = pneg %p307
        %s511 = sand.u32 %s297, 1
        %s512 = scalar_lea.sflag [#allocation4], %s511
        %s513 = sand.u32 %s297, 1
        %s514 = smul.addr %s513, 8
        %s515 = scalar_lea.vmem [#allocation14], %s514
        %v516 = vld [vmem:[%s451] sm:$0xff]
        %v517 = vld [vmem:[#allocation5] sm:$0xff]
        %v518 = vld [vmem:[#allocation5 + $0x8] sm:$0xff]
        %v519 = vld [vmem:[#allocation5 + $0x10] sm:$0xff]
        %v520 = vld [vmem:[#allocation5 + $0x18] sm:$0xff]
        %v521 = vld [vmem:[%s2] sm:$0x1]
        %v523 = vlaneseq
        %v524 = vshrl.u32 %v523, 7
        %v525 = vsub.s32 0, %v524
        %v526 = vrot.slane %v521, %v525
        %vm528 = vcmask 261120
        %v530 = vsel %vm528, %v516, 0
        %532 = vmatprep.subr.mxu0 0.0
        %533 = vmatpush1.msra.mxu0 %v517
        %534 = vmatprep.subr.mxu0 0.0
        %535 = vmatpush1.msra.mxu0 %v518
        %536 = vmatprep.subr.mxu0 0.0
        %537 = vmatpush1.msra.mxu0 %v519
        %538 = vmatprep.subr.mxu0 0.0
        %539 = vmatpush1.msra.mxu0 %v520
        %540 = vmatprep.subr.mxu0 0.0
        %541 = vmatpush1.msra.mxu0 0.0
        %542 = vmatprep.subr.mxu0 0.0
        %543 = vmatpush1.msra.mxu0 0.0
        %544 = vmatprep.subr.mxu0 0.0
        %545 = vmatpush1.msra.mxu0 0.0
        %546 = vmatprep.subr.mxu0 0.0
        %547 = vmatpush1.msra.mxu0 0.0
        %548 = vmatprep.subr.mxu0 0.0
        %549 = vmatpush1.msra.mxu0 0.0
        %550 = vmatprep.subr.mxu0 0.0
        %551 = vmatpush1.msra.mxu0 0.0
        %552 = vmatprep.subr.mxu0 0.0
        %553 = vmatpush1.msra.mxu0 0.0
        %554 = vmatprep.subr.mxu0 0.0
        %555 = vmatpush1.msra.mxu0 0.0
        %556 = vmatprep.subr.mxu0 0.0
        %557 = vmatpush1.msra.mxu0 0.0
        %558 = vmatprep.subr.mxu0 0.0
        %559 = vmatpush1.msra.mxu0 0.0
        %560 = vmatprep.subr.mxu0 0.0
        %561 = vmatpush1.msra.mxu0 0.0
        %562 = vmatprep.subr.mxu0 0.0
        %563 = vmatpush1.msra.mxu0 0.0
        %564 = vmatprep.subr.mxu0 0.0
        %565 = vmatpush1.msra.mxu0 0.0
        %566 = vmatprep.subr.mxu0 0.0
        %567 = vmatpush1.msra.mxu0 0.0
        %568 = vmatprep.subr.mxu0 0.0
        %569 = vmatpush1.msra.mxu0 0.0
        %570 = vmatprep.subr.mxu0 0.0
        %571 = vmatpush1.msra.mxu0 0.0
        %572 = vmatprep.subr.mxu0 0.0
        %573 = vmatpush1.msra.mxu0 0.0
        %574 = vmatprep.subr.mxu0 0.0
        %575 = vmatpush1.msra.mxu0 0.0
        %576 = vmatprep.subr.mxu0 0.0
        %577 = vmatpush1.msra.mxu0 0.0
        %578 = vmatprep.subr.mxu0 0.0
        %579 = vmatpush1.msra.mxu0 0.0
        %580 = vmatprep.subr.mxu0 0.0
        %581 = vmatpush1.msra.mxu0 0.0
        %582 = vmatprep.subr.mxu0 0.0
        %583 = vmatpush1.msra.mxu0 0.0
        %584 = vmatprep.subr.mxu0 0.0
        %585 = vmatpush1.msra.mxu0 0.0
        %586 = vmatprep.subr.mxu0 0.0
        %587 = vmatpush1.msra.mxu0 0.0
        %588 = vmatprep.subr.mxu0 0.0
        %589 = vmatpush1.msra.mxu0 0.0
        %590 = vmatprep.subr.mxu0 0.0
        %591 = vmatpush1.msra.mxu0 0.0
        %592 = vmatprep.subr.mxu0 0.0
        %593 = vmatpush1.msra.mxu0 0.0
        %594 = vmatprep.subr.mxu0 0.0
        %595 = vmatpush1.msra.mxu0 0.0
        %596 = vmatprep.mubr.f32.mxu0 0.0
        %597 = vmatmul.mubr.f32.gmra.mrb[0].mxu0 %v530
        %v598 = vpop.f32.mrb[0].mxu0
        %v599 = vadd.f32 %v526, %v598
        %v600 = vpop.f32.mrb[0].mxu0
        %601 = vdwg.mxu0
        %v602 = vmax.f32 %v599, 0.0
        %v603 = vld [vmem:[#allocation7] sm:$0xff]
        %v604 = vld [vmem:[#allocation7 + $0x8] sm:$0xff]
        %v605 = vld [vmem:[#allocation7 + $0x10] sm:$0xff]
        %v606 = vld [vmem:[#allocation7 + $0x18] sm:$0xff]
        %v607 = vld [vmem:[#allocation8] sm:$0xff]
        %v608 = vld [vmem:[#allocation8 + $0x8] sm:$0xff]
        %v609 = vld [vmem:[#allocation8 + $0x10] sm:$0xff]
        %v610 = vld [vmem:[#allocation8 + $0x18] sm:$0xff]
        %v612 = vsel %vm528, %v602, 0
        %614 = vmatprep.subr.mxu0 0.0
        %615 = vmatpush1.msra.mxu0 %v607
        %616 = vmatprep.subr.mxu0 0.0
        %617 = vmatpush1.msra.mxu0 %v608
        %618 = vmatprep.subr.mxu0 0.0
        %619 = vmatpush1.msra.mxu0 %v609
        %620 = vmatprep.subr.mxu0 0.0
        %621 = vmatpush1.msra.mxu0 %v610
        %622 = vmatprep.subr.mxu0 0.0
        %623 = vmatpush1.msra.mxu0 0.0
        %624 = vmatprep.subr.mxu0 0.0
        %625 = vmatpush1.msra.mxu0 0.0
        %626 = vmatprep.subr.mxu0 0.0
        %627 = vmatpush1.msra.mxu0 0.0
        %628 = vmatprep.subr.mxu0 0.0
        %629 = vmatpush1.msra.mxu0 0.0
        %630 = vmatprep.subr.mxu0 0.0
        %631 = vmatpush1.msra.mxu0 0.0
        %632 = vmatprep.subr.mxu0 0.0
        %633 = vmatpush1.msra.mxu0 0.0
        %634 = vmatprep.subr.mxu0 0.0
        %635 = vmatpush1.msra.mxu0 0.0
        %636 = vmatprep.subr.mxu0 0.0
        %637 = vmatpush1.msra.mxu0 0.0
        %638 = vmatprep.subr.mxu0 0.0
        %639 = vmatpush1.msra.mxu0 0.0
        %640 = vmatprep.subr.mxu0 0.0
        %641 = vmatpush1.msra.mxu0 0.0
        %642 = vmatprep.subr.mxu0 0.0
        %643 = vmatpush1.msra.mxu0 0.0
        %644 = vmatprep.subr.mxu0 0.0
        %645 = vmatpush1.msra.mxu0 0.0
        %646 = vmatprep.subr.mxu0 0.0
        %647 = vmatpush1.msra.mxu0 0.0
        %648 = vmatprep.subr.mxu0 0.0
        %649 = vmatpush1.msra.mxu0 0.0
        %650 = vmatprep.subr.mxu0 0.0
        %651 = vmatpush1.msra.mxu0 0.0
        %652 = vmatprep.subr.mxu0 0.0
        %653 = vmatpush1.msra.mxu0 0.0
        %654 = vmatprep.subr.mxu0 0.0
        %655 = vmatpush1.msra.mxu0 0.0
        %656 = vmatprep.subr.mxu0 0.0
        %657 = vmatpush1.msra.mxu0 0.0
        %658 = vmatprep.subr.mxu0 0.0
        %659 = vmatpush1.msra.mxu0 0.0
        %660 = vmatprep.subr.mxu0 0.0
        %661 = vmatpush1.msra.mxu0 0.0
        %662 = vmatprep.subr.mxu0 0.0
        %663 = vmatpush1.msra.mxu0 0.0
        %664 = vmatprep.subr.mxu0 0.0
        %665 = vmatpush1.msra.mxu0 0.0
        %666 = vmatprep.subr.mxu0 0.0
        %667 = vmatpush1.msra.mxu0 0.0
        %668 = vmatprep.subr.mxu0 0.0
        %669 = vmatpush1.msra.mxu0 0.0
        %670 = vmatprep.subr.mxu0 0.0
        %671 = vmatpush1.msra.mxu0 0.0
        %672 = vmatprep.subr.mxu0 0.0
        %673 = vmatpush1.msra.mxu0 0.0
        %674 = vmatprep.subr.mxu0 0.0
        %675 = vmatpush1.msra.mxu0 0.0
        %676 = vmatprep.subr.mxu0 0.0
        %677 = vmatpush1.msra.mxu0 0.0
        %678 = vmatprep.mubr.f32.mxu0 0.0
        %679 = vmatmul.mubr.f32.gmra.mrb[0].mxu0 %v612
        %v680 = vpop.f32.mrb[0].mxu0
        %v681 = vadd.f32 0.0, %v680
        %v682 = vpop.f32.mrb[0].mxu0
        %683 = vdwg.mxu0
        %684 = vmatprep.subr.mxu0 0.0
        %685 = vmatpush1.msra.mxu0 %v603
        %686 = vmatprep.subr.mxu0 0.0
        %687 = vmatpush1.msra.mxu0 %v604
        %688 = vmatprep.subr.mxu0 0.0
        %689 = vmatpush1.msra.mxu0 %v605
        %690 = vmatprep.subr.mxu0 0.0
        %691 = vmatpush1.msra.mxu0 %v606
        %692 = vmatprep.subr.mxu0 0.0
        %693 = vmatpush1.msra.mxu0 0.0
        %694 = vmatprep.subr.mxu0 0.0
        %695 = vmatpush1.msra.mxu0 0.0
        %696 = vmatprep.subr.mxu0 0.0
        %697 = vmatpush1.msra.mxu0 0.0
        %698 = vmatprep.subr.mxu0 0.0
        %699 = vmatpush1.msra.mxu0 0.0
        %700 = vmatprep.subr.mxu0 0.0
        %701 = vmatpush1.msra.mxu0 0.0
        %702 = vmatprep.subr.mxu0 0.0
        %703 = vmatpush1.msra.mxu0 0.0
        %704 = vmatprep.subr.mxu0 0.0
        %705 = vmatpush1.msra.mxu0 0.0
        %706 = vmatprep.subr.mxu0 0.0
        %707 = vmatpush1.msra.mxu0 0.0
        %708 = vmatprep.subr.mxu0 0.0
        %709 = vmatpush1.msra.mxu0 0.0
        %710 = vmatprep.subr.mxu0 0.0
        %711 = vmatpush1.msra.mxu0 0.0
        %712 = vmatprep.subr.mxu0 0.0
        %713 = vmatpush1.msra.mxu0 0.0
        %714 = vmatprep.subr.mxu0 0.0
        %715 = vmatpush1.msra.mxu0 0.0
        %716 = vmatprep.subr.mxu0 0.0
        %717 = vmatpush1.msra.mxu0 0.0
        %718 = vmatprep.subr.mxu0 0.0
        %719 = vmatpush1.msra.mxu0 0.0
        %720 = vmatprep.subr.mxu0 0.0
        %721 = vmatpush1.msra.mxu0 0.0
        %722 = vmatprep.subr.mxu0 0.0
        %723 = vmatpush1.msra.mxu0 0.0
        %724 = vmatprep.subr.mxu0 0.0
        %725 = vmatpush1.msra.mxu0 0.0
        %726 = vmatprep.subr.mxu0 0.0
        %727 = vmatpush1.msra.mxu0 0.0
        %728 = vmatprep.subr.mxu0 0.0
        %729 = vmatpush1.msra.mxu0 0.0
        %730 = vmatprep.subr.mxu0 0.0
        %731 = vmatpush1.msra.mxu0 0.0
        %732 = vmatprep.subr.mxu0 0.0
        %733 = vmatpush1.msra.mxu0 0.0
        %734 = vmatprep.subr.mxu0 0.0
        %735 = vmatpush1.msra.mxu0 0.0
        %736 = vmatprep.subr.mxu0 0.0
        %737 = vmatpush1.msra.mxu0 0.0
        %738 = vmatprep.subr.mxu0 0.0
        %739 = vmatpush1.msra.mxu0 0.0
        %740 = vmatprep.subr.mxu0 0.0
        %741 = vmatpush1.msra.mxu0 0.0
        %742 = vmatprep.subr.mxu0 0.0
        %743 = vmatpush1.msra.mxu0 0.0
        %744 = vmatprep.subr.mxu0 0.0
        %745 = vmatpush1.msra.mxu0 0.0
        %746 = vmatprep.subr.mxu0 0.0
        %747 = vmatpush1.msra.mxu0 0.0
        %748 = vmatprep.mubr.f32.mxu0 0.0
        %749 = vmatmul.mubr.f32.gmra.mrb[0].mxu0 %v530
        %v750 = vpop.f32.mrb[0].mxu0
        %v751 = vadd.f32 %v681, %v750
        %v752 = vpop.f32.mrb[0].mxu0
        %753 = vdwg.mxu0
        %v754 = vld [vmem:[%s5] sm:$0x1]
        %v756 = vlaneseq
        %v757 = vshrl.u32 %v756, 7
        %v758 = vsub.s32 0, %v757
        %v759 = vrot.slane %v754, %v758
        %v761 = vadd.f32 %v751, %v759
        %v762 = vmax.f32 %v761, 0.0
        %v763 = vld [vmem:[#allocation10] sm:$0xff]
        %v764 = vld [vmem:[#allocation10 + $0x8] sm:$0xff]
        %v765 = vld [vmem:[#allocation10 + $0x10] sm:$0xff]
        %v766 = vld [vmem:[#allocation10 + $0x18] sm:$0xff]
        %v767 = vld [vmem:[#allocation11] sm:$0xff]
        %v768 = vld [vmem:[#allocation11 + $0x8] sm:$0xff]
        %v769 = vld [vmem:[#allocation11 + $0x10] sm:$0xff]
        %v770 = vld [vmem:[#allocation11 + $0x18] sm:$0xff]
        %771 = vmatprep.subr.mxu0 0.0
        %772 = vmatpush1.msra.mxu0 %v767
        %773 = vmatprep.subr.mxu0 0.0
        %774 = vmatpush1.msra.mxu0 %v768
        %775 = vmatprep.subr.mxu0 0.0
        %776 = vmatpush1.msra.mxu0 %v769
        %777 = vmatprep.subr.mxu0 0.0
        %778 = vmatpush1.msra.mxu0 %v770
        %779 = vmatprep.subr.mxu0 0.0
        %780 = vmatpush1.msra.mxu0 0.0
        %781 = vmatprep.subr.mxu0 0.0
        %782 = vmatpush1.msra.mxu0 0.0
        %783 = vmatprep.subr.mxu0 0.0
        %784 = vmatpush1.msra.mxu0 0.0
        %785 = vmatprep.subr.mxu0 0.0
        %786 = vmatpush1.msra.mxu0 0.0
        %787 = vmatprep.subr.mxu0 0.0
        %788 = vmatpush1.msra.mxu0 0.0
        %789 = vmatprep.subr.mxu0 0.0
        %790 = vmatpush1.msra.mxu0 0.0
        %791 = vmatprep.subr.mxu0 0.0
        %792 = vmatpush1.msra.mxu0 0.0
        %793 = vmatprep.subr.mxu0 0.0
        %794 = vmatpush1.msra.mxu0 0.0
        %795 = vmatprep.subr.mxu0 0.0
        %796 = vmatpush1.msra.mxu0 0.0
        %797 = vmatprep.subr.mxu0 0.0
        %798 = vmatpush1.msra.mxu0 0.0
        %799 = vmatprep.subr.mxu0 0.0
        %800 = vmatpush1.msra.mxu0 0.0
        %801 = vmatprep.subr.mxu0 0.0
        %802 = vmatpush1.msra.mxu0 0.0
        %803 = vmatprep.subr.mxu0 0.0
        %804 = vmatpush1.msra.mxu0 0.0
        %805 = vmatprep.subr.mxu0 0.0
        %806 = vmatpush1.msra.mxu0 0.0
        %807 = vmatprep.subr.mxu0 0.0
        %808 = vmatpush1.msra.mxu0 0.0
        %809 = vmatprep.subr.mxu0 0.0
        %810 = vmatpush1.msra.mxu0 0.0
        %811 = vmatprep.subr.mxu0 0.0
        %812 = vmatpush1.msra.mxu0 0.0
        %813 = vmatprep.subr.mxu0 0.0
        %814 = vmatpush1.msra.mxu0 0.0
        %815 = vmatprep.subr.mxu0 0.0
        %816 = vmatpush1.msra.mxu0 0.0
        %817 = vmatprep.subr.mxu0 0.0
        %818 = vmatpush1.msra.mxu0 0.0
        %819 = vmatprep.subr.mxu0 0.0
        %820 = vmatpush1.msra.mxu0 0.0
        %821 = vmatprep.subr.mxu0 0.0
        %822 = vmatpush1.msra.mxu0 0.0
        %823 = vmatprep.subr.mxu0 0.0
        %824 = vmatpush1.msra.mxu0 0.0
        %825 = vmatprep.subr.mxu0 0.0
        %826 = vmatpush1.msra.mxu0 0.0
        %827 = vmatprep.subr.mxu0 0.0
        %828 = vmatpush1.msra.mxu0 0.0
        %829 = vmatprep.subr.mxu0 0.0
        %830 = vmatpush1.msra.mxu0 0.0
        %831 = vmatprep.subr.mxu0 0.0
        %832 = vmatpush1.msra.mxu0 0.0
        %833 = vmatprep.subr.mxu0 0.0
        %834 = vmatpush1.msra.mxu0 0.0
        %835 = vmatprep.mubr.f32.mxu0 0.0
        %836 = vmatmul.mubr.f32.gmra.mrb[0].mxu0 %v612
        %v837 = vpop.f32.mrb[0].mxu0
        %v838 = vadd.f32 0.0, %v837
        %v839 = vpop.f32.mrb[0].mxu0
        %840 = vdwg.mxu0
        %841 = vmatprep.subr.mxu0 0.0
        %842 = vmatpush1.msra.mxu0 %v763
        %843 = vmatprep.subr.mxu0 0.0
        %844 = vmatpush1.msra.mxu0 %v764
        %845 = vmatprep.subr.mxu0 0.0
        %846 = vmatpush1.msra.mxu0 %v765
        %847 = vmatprep.subr.mxu0 0.0
        %848 = vmatpush1.msra.mxu0 %v766
        %849 = vmatprep.subr.mxu0 0.0
        %850 = vmatpush1.msra.mxu0 0.0
        %851 = vmatprep.subr.mxu0 0.0
        %852 = vmatpush1.msra.mxu0 0.0
        %853 = vmatprep.subr.mxu0 0.0
        %854 = vmatpush1.msra.mxu0 0.0
        %855 = vmatprep.subr.mxu0 0.0
        %856 = vmatpush1.msra.mxu0 0.0
        %857 = vmatprep.subr.mxu0 0.0
        %858 = vmatpush1.msra.mxu0 0.0
        %859 = vmatprep.subr.mxu0 0.0
        %860 = vmatpush1.msra.mxu0 0.0
        %861 = vmatprep.subr.mxu0 0.0
        %862 = vmatpush1.msra.mxu0 0.0
        %863 = vmatprep.subr.mxu0 0.0
        %864 = vmatpush1.msra.mxu0 0.0
        %865 = vmatprep.subr.mxu0 0.0
        %866 = vmatpush1.msra.mxu0 0.0
        %867 = vmatprep.subr.mxu0 0.0
        %868 = vmatpush1.msra.mxu0 0.0
        %869 = vmatprep.subr.mxu0 0.0
        %870 = vmatpush1.msra.mxu0 0.0
        %871 = vmatprep.subr.mxu0 0.0
        %872 = vmatpush1.msra.mxu0 0.0
        %873 = vmatprep.subr.mxu0 0.0
        %874 = vmatpush1.msra.mxu0 0.0
        %875 = vmatprep.subr.mxu0 0.0
        %876 = vmatpush1.msra.mxu0 0.0
        %877 = vmatprep.subr.mxu0 0.0
        %878 = vmatpush1.msra.mxu0 0.0
        %879 = vmatprep.subr.mxu0 0.0
        %880 = vmatpush1.msra.mxu0 0.0
        %881 = vmatprep.subr.mxu0 0.0
        %882 = vmatpush1.msra.mxu0 0.0
        %883 = vmatprep.subr.mxu0 0.0
        %884 = vmatpush1.msra.mxu0 0.0
        %885 = vmatprep.subr.mxu0 0.0
        %886 = vmatpush1.msra.mxu0 0.0
        %887 = vmatprep.subr.mxu0 0.0
        %888 = vmatpush1.msra.mxu0 0.0
        %889 = vmatprep.subr.mxu0 0.0
        %890 = vmatpush1.msra.mxu0 0.0
        %891 = vmatprep.subr.mxu0 0.0
        %892 = vmatpush1.msra.mxu0 0.0
        %893 = vmatprep.subr.mxu0 0.0
        %894 = vmatpush1.msra.mxu0 0.0
        %895 = vmatprep.subr.mxu0 0.0
        %896 = vmatpush1.msra.mxu0 0.0
        %897 = vmatprep.subr.mxu0 0.0
        %898 = vmatpush1.msra.mxu0 0.0
        %899 = vmatprep.subr.mxu0 0.0
        %900 = vmatpush1.msra.mxu0 0.0
        %901 = vmatprep.subr.mxu0 0.0
        %902 = vmatpush1.msra.mxu0 0.0
        %903 = vmatprep.subr.mxu0 0.0
        %904 = vmatpush1.msra.mxu0 0.0
        %905 = vmatprep.mubr.f32.mxu0 0.0
        %906 = vmatmul.mubr.f32.gmra.mrb[0].mxu0 %v530
        %v907 = vpop.f32.mrb[0].mxu0
        %v908 = vadd.f32 %v838, %v907
        %v909 = vpop.f32.mrb[0].mxu0
        %910 = vdwg.mxu0
        %v911 = vld [vmem:[#allocation13] sm:$0xff]
        %v912 = vld [vmem:[#allocation13 + $0x8] sm:$0xff]
        %v913 = vld [vmem:[#allocation13 + $0x10] sm:$0xff]
        %v914 = vld [vmem:[#allocation13 + $0x18] sm:$0xff]
        %v916 = vsel %vm528, %v762, 0
        %918 = vmatprep.subr.mxu0 0.0
        %919 = vmatpush1.msra.mxu0 %v911
        %920 = vmatprep.subr.mxu0 0.0
        %921 = vmatpush1.msra.mxu0 %v912
        %922 = vmatprep.subr.mxu0 0.0
        %923 = vmatpush1.msra.mxu0 %v913
        %924 = vmatprep.subr.mxu0 0.0
        %925 = vmatpush1.msra.mxu0 %v914
        %926 = vmatprep.subr.mxu0 0.0
        %927 = vmatpush1.msra.mxu0 0.0
        %928 = vmatprep.subr.mxu0 0.0
        %929 = vmatpush1.msra.mxu0 0.0
        %930 = vmatprep.subr.mxu0 0.0
        %931 = vmatpush1.msra.mxu0 0.0
        %932 = vmatprep.subr.mxu0 0.0
        %933 = vmatpush1.msra.mxu0 0.0
        %934 = vmatprep.subr.mxu0 0.0
        %935 = vmatpush1.msra.mxu0 0.0
        %936 = vmatprep.subr.mxu0 0.0
        %937 = vmatpush1.msra.mxu0 0.0
        %938 = vmatprep.subr.mxu0 0.0
        %939 = vmatpush1.msra.mxu0 0.0
        %940 = vmatprep.subr.mxu0 0.0
        %941 = vmatpush1.msra.mxu0 0.0
        %942 = vmatprep.subr.mxu0 0.0
        %943 = vmatpush1.msra.mxu0 0.0
        %944 = vmatprep.subr.mxu0 0.0
        %945 = vmatpush1.msra.mxu0 0.0
        %946 = vmatprep.subr.mxu0 0.0
        %947 = vmatpush1.msra.mxu0 0.0
        %948 = vmatprep.subr.mxu0 0.0
        %949 = vmatpush1.msra.mxu0 0.0
        %950 = vmatprep.subr.mxu0 0.0
        %951 = vmatpush1.msra.mxu0 0.0
        %952 = vmatprep.subr.mxu0 0.0
        %953 = vmatpush1.msra.mxu0 0.0
        %954 = vmatprep.subr.mxu0 0.0
        %955 = vmatpush1.msra.mxu0 0.0
        %956 = vmatprep.subr.mxu0 0.0
        %957 = vmatpush1.msra.mxu0 0.0
        %958 = vmatprep.subr.mxu0 0.0
        %959 = vmatpush1.msra.mxu0 0.0
        %960 = vmatprep.subr.mxu0 0.0
        %961 = vmatpush1.msra.mxu0 0.0
        %962 = vmatprep.subr.mxu0 0.0
        %963 = vmatpush1.msra.mxu0 0.0
        %964 = vmatprep.subr.mxu0 0.0
        %965 = vmatpush1.msra.mxu0 0.0
        %966 = vmatprep.subr.mxu0 0.0
        %967 = vmatpush1.msra.mxu0 0.0
        %968 = vmatprep.subr.mxu0 0.0
        %969 = vmatpush1.msra.mxu0 0.0
        %970 = vmatprep.subr.mxu0 0.0
        %971 = vmatpush1.msra.mxu0 0.0
        %972 = vmatprep.subr.mxu0 0.0
        %973 = vmatpush1.msra.mxu0 0.0
        %974 = vmatprep.subr.mxu0 0.0
        %975 = vmatpush1.msra.mxu0 0.0
        %976 = vmatprep.subr.mxu0 0.0
        %977 = vmatpush1.msra.mxu0 0.0
        %978 = vmatprep.subr.mxu0 0.0
        %979 = vmatpush1.msra.mxu0 0.0
        %980 = vmatprep.subr.mxu0 0.0
        %981 = vmatpush1.msra.mxu0 0.0
        %982 = vmatprep.mubr.f32.mxu0 0.0
        %983 = vmatmul.mubr.f32.gmra.mrb[0].mxu0 %v916
        %v984 = vpop.f32.mrb[0].mxu0
        %v985 = vadd.f32 0.0, %v984
        %v986 = vpop.f32.mrb[0].mxu0
        %987 = vdwg.mxu0
        %v988 = vadd.f32 %v908, %v985
        %v989 = vld [vmem:[%s9] sm:$0x1]
        %v991 = vlaneseq
        %v992 = vshrl.u32 %v991, 7
        %v993 = vsub.s32 0, %v992
        %v994 = vrot.slane %v989, %v993
        %v996 = vadd.f32 %v988, %v994
        %v997 = vld [vmem:[%s10] sm:$0x1]
        %v998 = vld [vmem:[%s11] sm:$0x1]
        %vm999 = vcmask 785408
        %v1000 = vsel %vm999, %v996, 0.0
        %1001 = vadd.xlane.f32.xlu0 %v1000
        %v1002 = vpop.xlane.xlu0 %1001
        %v1003 = vrcp.pop 96.0
        %v1004 = vmul.f32 %v1002, %v1003
        %v1005 = vsub.f32 %v996, %v1004
        %v1006 = vmul.f32 %v1005, %v1005
        %v1007 = vsel %vm999, %v1006, 0.0
        %1008 = vadd.xlane.f32.xlu0 %v1007
        %v1009 = vpop.xlane.xlu0 %1008
        %v1010 = vmul.f32 %v1009, %v1003
        %v1011 = vadd.f32 %v1010, 1e-05
        %v1012 = vrsqrt.pop %v1011
        %v1013 = vmul.f32 %v1005, %v1012
        %v1015 = vlaneseq
        %v1016 = vshrl.u32 %v1015, 7
        %v1017 = vsub.s32 0, %v1016
        %v1018 = vrot.slane %v997, %v1017
        %v1020 = vmul.f32 %v1013, %v1018
        %v1022 = vlaneseq
        %v1023 = vshrl.u32 %v1022, 7
        %v1024 = vsub.s32 0, %v1023
        %v1025 = vrot.slane %v998, %v1024
        %v1027 = vadd.f32 %v1020, %v1025
        %v1028 = vtanh.pop %v1027
        %1029 = vst.msk [vmem:[%s515] sm:$0xff] %vm999, %v1028
        %s1030 = sand.u32 %s297, 1
        %s1031 = scalar_lea.sflag [#allocation4], %s1030
        %s1032 = sand.u32 %s297, 1
        %s1033 = smul.addr %s1032, 8
        %s1034 = scalar_lea.vmem [#allocation14], %s1033
        // Predicated region
        $region97: #{tpu_custom_call.1} parent=67 // pred_check
          %p1035 = pneg %p307
        $region98: #{tpu_custom_call.1} parent=67 // pred_check_branch
          %1037 = sbr.rel (%p1035) target = $region100
        $region99: #{tpu_custom_call.1} parent=67 // pred_region
          %s1039 = ssub.s32 128, 128
          %1040 = vsyncadd %s1031, %s1039
          %s1041 = smul.addr %s32, 128
          %s1042 = scalar_lea.hbm %s12, %s1041
          %s1044 = sshll.u32 %s1034, 4
          %s1045 = int_to_ptr.vmem [resolvable:$true] %s1044
          %1047 = dma.vmem_to_hbm [thread:$0]  %s1045, 128, %s1042, %s1031
        $region100: #{tpu_custom_call.1} parent=67 // pred_fallthru
          _
      $region68: #{tpu_custom_call.1} parent=5 // pred_fallthru
        _
      %p1048 = scmp.le.s32.totalorder 2, %s27
      // Predicated region
      $region101: #{tpu_custom_call.1} parent=5 // pred_check
        %p1049 = pneg %p1048
      $region102: #{tpu_custom_call.1} parent=5 // pred_check_branch
        %1051 = sbr.rel (%p1049) target = $region104
      $region103: #{tpu_custom_call.1} parent=5 // pred_region
        %s1052 = ssub.s32 %s27, 2
        // Predicated region
        $region105: #{tpu_custom_call.1} parent=103 // pred_check
          %p1053 = pneg %p313
        $region106: #{tpu_custom_call.1} parent=103 // pred_check_branch
          %1055 = sbr.rel (%p1053) target = $region108
        $region107: #{tpu_custom_call.1} parent=103 // pred_region
          %s1056 = sand.u32 %s298, 1
          %s1057 = scalar_lea.sflag [#allocation4], %s1056
          %s1058 = sand.u32 %s298, 1
          %s1059 = smul.addr %s1058, 8
          %s1060 = scalar_lea.vmem [#allocation14], %s1059
          %1061 = dma.done %s1057, 128
        $region108: #{tpu_custom_call.1} parent=103 // pred_fallthru
          _
      $region104: #{tpu_custom_call.1} parent=5 // pred_fallthru
        _
    $region6: #{tpu_custom_call.1} parent=1 // loop_footer
      %s31 = sadd.s32 1, %s27
    $region7: #{tpu_custom_call.1} parent=1 // loop_footer_branch
      %26 = sbr.rel target = $region3
    $region8: #{tpu_custom_call.1} parent=1 // loop_exit
      _
    %1062 = vsyncpa [#allocation3], 1
    %s1063 = scalar_lea.sflag [#allocation3], 1
    %1064 = vsyncpa %s1063, 1
    %1065 = vsyncpa [#allocation6], 1
    %1066 = vsyncpa [#allocation9], 1
    %1067 = vsyncpa [#allocation12], 1
    %1068 = vsyncpa [#allocation4], 1
    %s1069 = scalar_lea.sflag [#allocation4], 1
    %1070 = vsyncpa %s1069, 1

</llo_original>
